<compile_context>
chip_gen: v6e
topology: v6e:2x2x1
jax: 0.10.0
libtpu: 0.0.40
codegen_flags: <defaults>
</compile_context>

<pallas_src>
import numpy as np
import jax
import jax.numpy as jnp
from jax.experimental import pallas as pl
from jax.experimental.pallas import tpu as pltpu

# ---------------- configuration (small, consistent with the module) ----------------
B = 8            # batch size (fills the 8 f32 sublanes of a vreg)
DIN = 16         # input_size
HIDDEN = 32      # hidden size (equal across reservoirs; torch.stack requires it)
NUM_ESNS = 4     # number of reservoir cells
T = 8            # sequence length driven through the cell

UD = NUM_ESNS * DIN        # 64
UH = NUM_ESNS * HIDDEN     # 128  (exactly one vreg lane width)
P_ROWS = UH + UD + 2       # 194 rows in the packed parameter buffer


# --------------------------------- Pallas kernel -----------------------------------
def group_esn_seq_kernel(x_ref, h0_ref, p_ref, out_ref, slab_ref):
    """One grid step == one recurrence step t.

    x_ref    : (1, B, UD)    this step's inputs, lane-dense flat layout
    h0_ref   : (B, UH)       initial hidden state (consumed only at t == 0)
    p_ref    : (P_ROWS, UH)  packed params, rows:
                 [0      : UH     )  block-diag recurrent kernels  (UH, UH)
                 [UH     : UH+UD  )  block-diag input kernels      (UD, UH)
                 [UH+UD            ] stacked biases, flattened     (1, UH)
                 [UH+UD+1          ] leak rates repeated per hidden(1, UH)
    out_ref  : (1, B, UH)    this step's leaky output
    slab_ref : (B, UH+UD)    VMEM-resident activation slab [ h | x ],
                             carried across grid steps
    """
    f32 = jnp.float32
    t = pl.program_id(0)

    @pl.when(t == 0)
    def _():
        slab_ref[:, 0:UH] = h0_ref[...]          # seed the resident state once

    # Stream this step's x into the slab, adjacent to the resident state.
    slab_ref[:, UH:UH + UD] = x_ref[0]

    w = p_ref[pl.ds(0, UH + UD), :]               # (UH+UD, UH) = [W_rec_bd ; W_in_bd]
    bias = p_ref[pl.ds(UH + UD, 1), :]            # (1, UH)
    leak = p_ref[pl.ds(UH + UD + 1, 1), :]        # (1, UH)

    h = slab_ref[:, 0:UH]                         # (B, UH), lane-aligned load
    # Single fused MXU matmul: h @ W_rec_bd + x @ W_in_bd, then bias.
    pre = jnp.dot(slab_ref[...], w, preferred_element_type=f32) + bias
    # Leaky integration: h*(1-leak) + tanh(pre)*leak  ==  h + leak*(tanh(pre) - h)
    h_new = h + leak * (jnp.tanh(pre) - h)

    slab_ref[:, 0:UH] = h_new                     # carry state to the next step
    out_ref[0] = h_new                            # per-step leaky output


# ------------------------------------ wrapper ---------------------------------------
def _block_diag(w):
    """(U, din, dout) grouped weights -> (U*din, U*dout) block-diagonal matrix."""
    U, din, dout = w.shape
    eye = jnp.eye(U, dtype=w.dtype)
    return jnp.einsum('uio,uv->uivo', w, eye).reshape(U * din, U * dout)


def pack_params(kernels, recurrent_kernels, biases, leakies):
    """Pack all static parameters into one lane-dense (P_ROWS, UH) f32 buffer."""
    w_rec_bd = _block_diag(recurrent_kernels)                     # (UH, UH)
    w_in_bd = _block_diag(kernels)                                # (UD, UH)
    bias_flat = biases.reshape(1, UH)                             # (1, UH)
    leak_flat = jnp.repeat(leakies, HIDDEN).reshape(1, UH)        # (1, UH)
    return jnp.concatenate([w_rec_bd, w_in_bd, bias_flat, leak_flat],
                           axis=0).astype(jnp.float32)


def group_esn_sequence(x_seq, h0, packed_params):
    """Run T recurrence steps of the GroupESNCell in ONE pallas_call.

    x_seq: (T, U, B, DIN), h0: (U, B, H)
    returns (leaky_outputs (T, U, B, H), final_state (U, B, H)).
    """
    Tn, U, Bd, Din = x_seq.shape
    H = h0.shape[-1]

    # One-time layout change (off the per-step path): group-major -> lane-dense flat.
    x_flat = jnp.transpose(x_seq, (0, 2, 1, 3)).reshape(Tn, Bd, U * Din)   # (T, B, UD)
    h0_flat = jnp.transpose(h0, (1, 0, 2)).reshape(Bd, U * H)              # (B, UH)

    out_flat = pl.pallas_call(
        group_esn_seq_kernel,
        out_shape=jax.ShapeDtypeStruct((Tn, Bd, U * H), jnp.float32),
        grid_spec=pltpu.PrefetchScalarGridSpec(
            num_scalar_prefetch=0,
            grid=(Tn,),
            in_specs=[
                pl.BlockSpec((1, Bd, U * Din), lambda t: (t, 0, 0)),   # stream x_t
                pl.BlockSpec((Bd, U * H), lambda t: (0, 0)),           # h0 (constant)
                pl.BlockSpec((P_ROWS, U * H), lambda t: (0, 0)),       # params resident
            ],
            out_specs=pl.BlockSpec((1, Bd, U * H), lambda t: (t, 0, 0)),
            scratch_shapes=[pltpu.VMEM((Bd, U * H + U * Din), jnp.float32)],
        ),
        compiler_params=pltpu.CompilerParams(
            dimension_semantics=("arbitrary",)),   # recurrence => sequential axis
    )(x_flat, h0_flat, packed_params)

    out_seq = jnp.transpose(out_flat.reshape(Tn, Bd, U, H), (0, 2, 1, 3))  # (T, U, B, H)
    return out_seq, out_seq[-1]


group_esn_sequence_jit = jax.jit(group_esn_sequence)


def group_esn_forward(xt, h_prev, packed_params):
    """Single-step forward matching GroupESNCell.forward(xt, h_prev)."""
    out_seq, _ = group_esn_sequence(xt[None], h_prev, packed_params)
    out = out_seq[0]
    return out, out


# ------------------------------ pure-JAX reference ----------------------------------
def group_esn_ref_step(xt, h_prev, kernels, recurrent_kernels, biases, leakies):
    """Mirrors GroupESNCell.forward (torch.bmm + permutes + tanh + leaky blend)."""
    input_part = jnp.einsum('ubi,uio->ubo', xt, kernels)
    state_part = jnp.einsum('ubh,uho->ubo', h_prev, recurrent_kernels)
    output = jnp.tanh(input_part + biases[:, None, :] + state_part)
    leak = leakies[:, None, None]
    return h_prev * (1.0 - leak) + output * leak


# --------------------------------------- main ---------------------------------------
if __name__ == "__main__":
    key = jax.random.PRNGKey(0)
    ks = jax.random.split(key, 6)

    x_seq = jax.random.normal(ks[0], (T, NUM_ESNS, B, DIN), jnp.float32)
    h0 = jax.random.normal(ks[1], (NUM_ESNS, B, HIDDEN), jnp.float32)

    # Random dense stand-ins for the sparse / spectral-radius-scaled init (that init
    # is host-side preprocessing; the forward semantics do not depend on it).
    kernels = 0.2 * jax.random.normal(ks[2], (NUM_ESNS, DIN, HIDDEN), jnp.float32)
    recurrent_kernels = 0.1 * jax.random.normal(ks[3], (NUM_ESNS, HIDDEN, HIDDEN), jnp.float32)
    biases = jax.random.uniform(ks[4], (NUM_ESNS, HIDDEN), jnp.float32) * 2.0 - 1.0
    leakies = jnp.array([1.0, 0.75, 0.5, 0.9], jnp.float32)

    packed = pack_params(kernels, recurrent_kernels, biases, leakies)

    # Run the whole T-step recurrence in one kernel launch.
    out_seq, h_last = group_esn_sequence_jit(x_seq, h0, packed)
    out_seq = jax.block_until_ready(out_seq)

    # Reference: scan of the pure-JAX single-step cell.
    def step(h, x):
        h_new = group_esn_ref_step(x, h, kernels, recurrent_kernels, biases, leakies)
        return h_new, h_new

    _, ref_seq = jax.lax.scan(step, h0, x_seq)

    # Tolerance accounts for TPU default f32 matmul precision (bf16 passes on the
    # MXU) accumulated over the 8-step recurrence.
    np.testing.assert_allclose(np.asarray(out_seq), np.asarray(ref_seq),
                               rtol=2e-2, atol=2e-2)

    # Also exercise the single-step forward (module's forward signature).
    out1, _ = group_esn_forward(x_seq[0], h0, packed)
    out1 = jax.block_until_ready(out1)
    ref1 = group_esn_ref_step(x_seq[0], h0, kernels, recurrent_kernels, biases, leakies)
    np.testing.assert_allclose(np.asarray(out1), np.asarray(ref1),
                               rtol=2e-2, atol=2e-2)

    print("KERNEL_OK")
</pallas_src>

<mosaic_0001>
module attributes {stable_mosaic.version = 11 : i64} {
  func.func @group_esn_seq_kernel(%arg0: i32, %arg1: memref<1x8x64xf32, #tpu.memory_space<vmem>>, %arg2: memref<8x128xf32, #tpu.memory_space<vmem>>, %arg3: memref<194x128xf32, #tpu.memory_space<vmem>>, %arg4: memref<1x8x128xf32, #tpu.memory_space<vmem>>, %arg5: memref<8x192xf32, #tpu.memory_space<vmem>>) attributes {dimension_semantics = [#tpu.dimension_semantics<arbitrary>], iteration_bounds = array<i64: 8>, scalar_prefetch = 0 : i64, scratch_operands = 1 : i64, tpu.core_type = #tpu.core_type<tc>, window_params = [{transform_indices = @transform_0, window_bounds = array<i64: 1, 8, 64>}, {pipeline_mode = #tpu.pipeline_mode<synchronous>, transform_indices = @transform_1, window_bounds = array<i64: 8, 128>}, {pipeline_mode = #tpu.pipeline_mode<synchronous>, transform_indices = @transform_2, window_bounds = array<i64: 194, 128>}, {transform_indices = @transform_3, window_bounds = array<i64: 1, 8, 128>}]} {
    %c0_i32 = arith.constant 0 : i32
    %0 = arith.cmpi eq, %arg0, %c0_i32 : i32
    %1 = arith.extui %0 : i1 to i32
    %c0_i32_0 = arith.constant 0 : i32
    %2 = arith.cmpi ne, %1, %c0_i32_0 : i32
    scf.if %2 {
      %c0_17 = arith.constant 0 : index
      %c0_18 = arith.constant 0 : index
      %23 = vector.load %arg2[%c0_17, %c0_18] : memref<8x128xf32, #tpu.memory_space<vmem>>, vector<8x128xf32>
      %c0_19 = arith.constant 0 : index
      %c0_20 = arith.constant 0 : index
      %24 = vector.load %arg5[%c0_19, %c0_20] : memref<8x192xf32, #tpu.memory_space<vmem>>, vector<8x128xf32>
      tpu.vector_store %arg5[%c0_19, %c0_20], %23 {strides = array<i32>} : memref<8x192xf32, #tpu.memory_space<vmem>>, vector<8x128xf32>,
    } else {
    }
    %c0 = arith.constant 0 : index
    %c0_1 = arith.constant 0 : index
    %c0_2 = arith.constant 0 : index
    %3 = vector.load %arg1[%c0, %c0_1, %c0_2] : memref<1x8x64xf32, #tpu.memory_space<vmem>>, vector<1x8x64xf32>
    %4 = vector.shape_cast %3 : vector<1x8x64xf32> to vector<8x64xf32>
    %c0_3 = arith.constant 0 : index
    %c128 = arith.constant 128 : index
    %5 = vector.load %arg5[%c0_3, %c128] : memref<8x192xf32, #tpu.memory_space<vmem>>, vector<8x64xf32>
    tpu.vector_store %arg5[%c0_3, %c128], %4 {strides = array<i32>} : memref<8x192xf32, #tpu.memory_space<vmem>>, vector<8x64xf32>,
    %c0_4 = arith.constant 0 : index
    %c0_5 = arith.constant 0 : index
    %6 = vector.load %arg3[%c0_4, %c0_5] : memref<194x128xf32, #tpu.memory_space<vmem>>, vector<192x128xf32>
    %c192 = arith.constant 192 : index
    %c0_6 = arith.constant 0 : index
    %7 = vector.load %arg3[%c192, %c0_6] : memref<194x128xf32, #tpu.memory_space<vmem>>, vector<1x128xf32>
    %c193 = arith.constant 193 : index
    %c0_7 = arith.constant 0 : index
    %8 = vector.load %arg3[%c193, %c0_7] : memref<194x128xf32, #tpu.memory_space<vmem>>, vector<1x128xf32>
    %c0_8 = arith.constant 0 : index
    %c0_9 = arith.constant 0 : index
    %9 = vector.load %arg5[%c0_8, %c0_9] : memref<8x192xf32, #tpu.memory_space<vmem>>, vector<8x128xf32>
    %c0_10 = arith.constant 0 : index
    %c0_11 = arith.constant 0 : index
    %10 = vector.load %arg5[%c0_10, %c0_11] : memref<8x192xf32, #tpu.memory_space<vmem>>, vector<8x192xf32>
    %cst = arith.constant dense<0.000000e+00> : vector<8x128xf32>
    %11 = tpu.matmul %10, %6, %cst {dimension_numbers = #tpu.dot_dimension_numbers<[1], [0], [0], [1], [0, 0, 1, 1], [], []>} : vector<8x192xf32>, vector<192x128xf32>, vector<8x128xf32> -> vector<8x128xf32>
    %12 = vector.broadcast %7 : vector<1x128xf32> to vector<8x128xf32>
    %13 = arith.addf %11, %12 : vector<8x128xf32>
    %14 = math.tanh %13 : vector<8x128xf32>
    %15 = arith.subf %14, %9 : vector<8x128xf32>
    %16 = vector.broadcast %8 : vector<1x128xf32> to vector<8x128xf32>
    %17 = arith.mulf %16, %15 : vector<8x128xf32>
    %18 = arith.addf %9, %17 : vector<8x128xf32>
    %c0_12 = arith.constant 0 : index
    %c0_13 = arith.constant 0 : index
    %19 = vector.load %arg5[%c0_12, %c0_13] : memref<8x192xf32, #tpu.memory_space<vmem>>, vector<8x128xf32>
    tpu.vector_store %arg5[%c0_12, %c0_13], %18 {strides = array<i32>} : memref<8x192xf32, #tpu.memory_space<vmem>>, vector<8x128xf32>,
    %c0_14 = arith.constant 0 : index
    %c0_15 = arith.constant 0 : index
    %c0_16 = arith.constant 0 : index
    %20 = vector.load %arg4[%c0_14, %c0_15, %c0_16] : memref<1x8x128xf32, #tpu.memory_space<vmem>>, vector<1x8x128xf32>
    %21 = vector.shape_cast %20 : vector<1x8x128xf32> to vector<8x128xf32>
    %22 = vector.shape_cast %18 : vector<8x128xf32> to vector<1x8x128xf32>
    tpu.vector_store %arg4[%c0_14, %c0_15, %c0_16], %22 {strides = array<i32>} : memref<1x8x128xf32, #tpu.memory_space<vmem>>, vector<1x8x128xf32>,
    return
  }
  func.func @transform_0(%arg0: i32) -> (i32, i32, i32) {
    %c0_i32 = arith.constant 0 : i32
    %c0_i32_0 = arith.constant 0 : i32
    %c0_i32_1 = arith.constant 0 : i32
    return %arg0, %c0_i32, %c0_i32_0 : i32, i32, i32
  }
  func.func @transform_1(%arg0: i32) -> (i32, i32) {
    %c0_i32 = arith.constant 0 : i32
    %c0_i32_0 = arith.constant 0 : i32
    %c0_i32_1 = arith.constant 0 : i32
    return %c0_i32, %c0_i32_0 : i32, i32
  }
  func.func @transform_2(%arg0: i32) -> (i32, i32) {
    %c0_i32 = arith.constant 0 : i32
    %c0_i32_0 = arith.constant 0 : i32
    %c0_i32_1 = arith.constant 0 : i32
    return %c0_i32, %c0_i32_0 : i32, i32
  }
  func.func @transform_3(%arg0: i32) -> (i32, i32, i32) {
    %c0_i32 = arith.constant 0 : i32
    %c0_i32_0 = arith.constant 0 : i32
    %c0_i32_1 = arith.constant 0 : i32
    return %arg0, %c0_i32, %c0_i32_0 : i32, i32, i32
  }
}

</mosaic_0001>

<llo_original>
// kernel: group_esn_sequence.1
$region0: #{group_esn_sequence.1}
  #allocation0 [shape = 'u32[]', space=smem, size = 0x4, offset = 0x4, fixed_abs, tag = 'smem constant byte address 0x4 - core index']
  #allocation1 [shape = 'u32[144,128]{1,0:T(1,128)}', space=vmem, size = 0x12000, scoped, tag = 'internal scratch']
  #allocation2 [shape = 'f32[8,192]{1,0:T(8,128)}', space=vmem, size = 0x2000, scoped, tag = 'scratch operand']
  %s0 = inlined_call_operand.vmem [shape: f32[8,8,64], index: 0, kind: input, shape index: {}]
  %s1 = inlined_call_operand.vmem [shape: f32[8,128], index: 1, kind: input, shape index: {}]
  %s2 = inlined_call_operand.vmem [shape: f32[194,128], index: 2, kind: input, shape index: {}]
  %s3 = inlined_call_operand.vmem [shape: f32[8,8,128], index: 3, kind: output, shape index: {}]
  %s4 = sld [smem:[#allocation0]]
  $region49: #{group_esn_sequence.1} parent=0
    _
  %s6 = ssub.s32 1, %s4
  %s7 = scalar_select 0, %s6, %s4
  loop: start=0, step=1, limit=10
  $region2: #{group_esn_sequence.1} parent=0 // loop_pre_header
    _
  $region3: #{group_esn_sequence.1} parent=0 // loop_header
    %s9 = sphi 0, %s13
    %p10 = scmp.ge.s32.totalorder %s9, 10
    %s19 = sphi 0, %s21
    %s22 = sphi 0, %s19
    %s23 = sphi 0, %s22
    %s39 = sphi 0, %s23
    %s43 = sphi 0, %s43
    %s45 = sphi 0, %s43
    %s46 = sphi 0, %s45
    %s60 = sphi 0, %s46
    %s64 = sphi 0, %s64
    %s66 = sphi 0, %s64
    %s67 = sphi 0, %s66
    %s81 = sphi 0, %s67
    %s87 = sphi 0, %s89
    %s90 = sphi 0, %s87
    %s91 = sphi 0, %s90
    %s107 = sphi 0, %s91
  $region4: #{group_esn_sequence.1} parent=0 // loop_header_branch
    %12 = sbr.rel (%p10) target = $region8
  $region5: #{group_esn_sequence.1} parent=0 // loop_body
    %s14 = ssub.s32 %s9, 1
    %s15 = ssub.s32 %s9, 2
    %s16 = sadd.s32 %s9, 1
    %s17 = ssub.s32 %s9, %s16
    %p18 = scmp.eq.s32.totalorder %s17, 0
    %s20 = sadd.s32 %s19, 1
    %s21 = scalar_select %p18, %s19, %s20
    %p24 = pneg %p18
    %p25 = scmp.eq.s32.totalorder %s9, 7
    %p26 = por %p24, %p25
    %p27 = scmp.ne.s32.totalorder %s19, %s22
    %p28 = scmp.eq.s32.totalorder %s9, 0
    %p29 = por %p27, %p28
    %p30 = scmp.ne.s32.totalorder %s19, %s22
    %p31 = scmp.eq.s32.totalorder %s14, 7
    %p32 = por %p30, %p31
    %p33 = scmp.ne.s32.totalorder %s22, %s23
    %p34 = scmp.eq.s32.totalorder %s14, 0
    %p35 = por %p33, %p34
    %p36 = scmp.ne.s32.totalorder %s22, %s23
    %p37 = scmp.eq.s32.totalorder %s15, 7
    %p38 = por %p36, %p37
    %p40 = scmp.ne.s32.totalorder %s23, %s39
    %p41 = scmp.eq.s32.totalorder %s15, 0
    %p42 = por %p40, %p41
    %s44 = sadd.s32 %s43, 1
    %p47 = scmp.eq.s32.totalorder %s9, 7
    %p48 = scmp.ne.s32.totalorder %s43, %s45
    %p49 = scmp.eq.s32.totalorder %s9, 0
    %p50 = por %p48, %p49
    %p51 = scmp.ne.s32.totalorder %s43, %s45
    %p52 = scmp.eq.s32.totalorder %s14, 7
    %p53 = por %p51, %p52
    %p54 = scmp.ne.s32.totalorder %s45, %s46
    %p55 = scmp.eq.s32.totalorder %s14, 0
    %p56 = por %p54, %p55
    %p57 = scmp.ne.s32.totalorder %s45, %s46
    %p58 = scmp.eq.s32.totalorder %s15, 7
    %p59 = por %p57, %p58
    %p61 = scmp.ne.s32.totalorder %s46, %s60
    %p62 = scmp.eq.s32.totalorder %s15, 0
    %p63 = por %p61, %p62
    %s65 = sadd.s32 %s64, 1
    %p68 = scmp.eq.s32.totalorder %s9, 7
    %p69 = scmp.ne.s32.totalorder %s64, %s66
    %p70 = scmp.eq.s32.totalorder %s9, 0
    %p71 = por %p69, %p70
    %p72 = scmp.ne.s32.totalorder %s64, %s66
    %p73 = scmp.eq.s32.totalorder %s14, 7
    %p74 = por %p72, %p73
    %p75 = scmp.ne.s32.totalorder %s66, %s67
    %p76 = scmp.eq.s32.totalorder %s14, 0
    %p77 = por %p75, %p76
    %p78 = scmp.ne.s32.totalorder %s66, %s67
    %p79 = scmp.eq.s32.totalorder %s15, 7
    %p80 = por %p78, %p79
    %p82 = scmp.ne.s32.totalorder %s67, %s81
    %p83 = scmp.eq.s32.totalorder %s15, 0
    %p84 = por %p82, %p83
    %s85 = ssub.s32 %s9, %s16
    %p86 = scmp.eq.s32.totalorder %s85, 0
    %s88 = sadd.s32 %s87, 1
    %s89 = scalar_select %p86, %s87, %s88
    %p92 = pneg %p86
    %p93 = scmp.eq.s32.totalorder %s9, 7
    %p94 = por %p92, %p93
    %p95 = scmp.ne.s32.totalorder %s87, %s90
    %p96 = scmp.eq.s32.totalorder %s9, 0
    %p97 = por %p95, %p96
    %p98 = scmp.ne.s32.totalorder %s87, %s90
    %p99 = scmp.eq.s32.totalorder %s14, 7
    %p100 = por %p98, %p99
    %p101 = scmp.ne.s32.totalorder %s90, %s91
    %p102 = scmp.eq.s32.totalorder %s14, 0
    %p103 = por %p101, %p102
    %p104 = scmp.ne.s32.totalorder %s90, %s91
    %p105 = scmp.eq.s32.totalorder %s15, 7
    %p106 = por %p104, %p105
    %p108 = scmp.ne.s32.totalorder %s91, %s107
    %p109 = scmp.eq.s32.totalorder %s15, 0
    %p110 = por %p108, %p109
    %p111 = scmp.le.s32.totalorder 1, %s9
    %p112 = scmp.lt.s32.totalorder %s9, 9
    %p113 = pnand %p111, %p112
    %p114 = pneg %p113
    // Predicated region
    $region9: #{group_esn_sequence.1} parent=5 // pred_check
      _
    $region10: #{group_esn_sequence.1} parent=5 // pred_check_branch
      %116 = sbr.rel (%p113) target = $region12
    $region11: #{group_esn_sequence.1} parent=5 // pred_region
      %s117 = ssub.s32 %s9, 1
      // Predicated region
      $region13: #{group_esn_sequence.1} parent=11 // pred_check
        %p118 = pneg %p56
      $region14: #{group_esn_sequence.1} parent=11 // pred_check_branch
        %120 = sbr.rel (%p118) target = $region16
      $region15: #{group_esn_sequence.1} parent=11 // pred_region
        _
      $region16: #{group_esn_sequence.1} parent=11 // pred_fallthru
        _
      // Predicated region
      $region17: #{group_esn_sequence.1} parent=11 // pred_check
        %p121 = pneg %p77
      $region18: #{group_esn_sequence.1} parent=11 // pred_check_branch
        %123 = sbr.rel (%p121) target = $region20
      $region19: #{group_esn_sequence.1} parent=11 // pred_region
        _
      $region20: #{group_esn_sequence.1} parent=11 // pred_fallthru
        _
    $region12: #{group_esn_sequence.1} parent=5 // pred_fallthru
      _
    %p124 = scmp.lt.s32.totalorder %s9, 8
    // Predicated region
    $region21: #{group_esn_sequence.1} parent=5 // pred_check
      %p125 = pneg %p124
    $region22: #{group_esn_sequence.1} parent=5 // pred_check_branch
      %127 = sbr.rel (%p125) target = $region24
    $region23: #{group_esn_sequence.1} parent=5 // pred_region
      // Predicated region
      $region25: #{group_esn_sequence.1} parent=23 // pred_check
        %p128 = pneg %p29
      $region26: #{group_esn_sequence.1} parent=23 // pred_check_branch
        %130 = sbr.rel (%p128) target = $region28
      $region27: #{group_esn_sequence.1} parent=23 // pred_region
        %p131 = scmp.lt.s32.totalorder %s9, 7
        %s132 = scalar_select %p131, %s9, 7
        %s133 = smul.addr %s132, 8
        %s134 = scalar_lea.vmem %s0, %s133
      $region28: #{group_esn_sequence.1} parent=23 // pred_fallthru
        _
    $region24: #{group_esn_sequence.1} parent=5 // pred_fallthru
      _
    %p135 = scmp.le.s32.totalorder 1, %s9
    %p136 = scmp.lt.s32.totalorder %s9, 9
    %p137 = pnand %p135, %p136
    %p138 = pneg %p137
    // Predicated region
    $region29: #{group_esn_sequence.1} parent=5 // pred_check
      _
    $region30: #{group_esn_sequence.1} parent=5 // pred_check_branch
      %140 = sbr.rel (%p137) target = $region32
    $region31: #{group_esn_sequence.1} parent=5 // pred_region
      %s141 = ssub.s32 %s9, 1
      %p142 = scmp.lt.s32.totalorder %s14, 7
      %s143 = scalar_select %p142, %s14, 7
      %s144 = smul.addr %s143, 8
      %s145 = scalar_lea.vmem %s0, %s144
      %p146 = pneg %p35
      %p147 = pneg %p32
      %p148 = pneg %p56
      %p149 = pneg %p53
      %p150 = pneg %p77
      %p151 = pneg %p74
      %p152 = pneg %p103
      %p153 = pneg %p100
      %p154 = scmp.lt.s32.totalorder %s14, 7
      %s155 = scalar_select %p154, %s14, 7
      %s156 = smul.addr %s155, 8
      %s157 = scalar_lea.vmem %s3, %s156
      %p158 = scmp.lt.s32.totalorder %s14, 7
      %s159 = scalar_select %p158, %s14, 7
      %s160 = smul.addr %s159, 8
      %s161 = scalar_lea.vmem %s0, %s160
      %p162 = scmp.lt.s32.totalorder %s14, 7
      %s163 = scalar_select %p162, %s14, 7
      %s164 = smul.addr %s163, 8
      %s165 = scalar_lea.vmem %s3, %s164
      %p166 = scmp.eq.s32.totalorder %s14, 0
      // Predicated region
      $region33: #{group_esn_sequence.1} parent=31 // pred_check
        %p167 = pneg %p166
      $region34: #{group_esn_sequence.1} parent=31 // pred_check_branch
        %169 = sbr.rel (%p167) target = $region36
      $region35: #{group_esn_sequence.1} parent=31 // pred_region
        %v170 = vld [vmem:[%s1] sm:$0xff]
        %171 = vst [vmem:[#allocation2] sm:$0xff] %v170
      $region36: #{group_esn_sequence.1} parent=31 // pred_fallthru
        _
      %v172 = vld [vmem:[%s161] sm:$0xff]
      %vm173 = vcmask 523264
      %174 = vst.msk [vmem:[#allocation2 + $0x8] sm:$0xff] %vm173, %v172
      %v175 = vld [vmem:[%s2] sm:$0xff]
      %v176 = vld [vmem:[%s2 + $0x8] sm:$0xff]
      %v177 = vld [vmem:[%s2 + $0x10] sm:$0xff]
      %v178 = vld [vmem:[%s2 + $0x18] sm:$0xff]
      %v179 = vld [vmem:[%s2 + $0x20] sm:$0xff]
      %v180 = vld [vmem:[%s2 + $0x28] sm:$0xff]
      %v181 = vld [vmem:[%s2 + $0x30] sm:$0xff]
      %v182 = vld [vmem:[%s2 + $0x38] sm:$0xff]
      %v183 = vld [vmem:[%s2 + $0x40] sm:$0xff]
      %v184 = vld [vmem:[%s2 + $0x48] sm:$0xff]
      %v185 = vld [vmem:[%s2 + $0x50] sm:$0xff]
      %v186 = vld [vmem:[%s2 + $0x58] sm:$0xff]
      %v187 = vld [vmem:[%s2 + $0x60] sm:$0xff]
      %v188 = vld [vmem:[%s2 + $0x68] sm:$0xff]
      %v189 = vld [vmem:[%s2 + $0x70] sm:$0xff]
      %v190 = vld [vmem:[%s2 + $0x78] sm:$0xff]
      %v191 = vld [vmem:[%s2 + $0x80] sm:$0xff]
      %v192 = vld [vmem:[%s2 + $0x88] sm:$0xff]
      %v193 = vld [vmem:[%s2 + $0x90] sm:$0xff]
      %v194 = vld [vmem:[%s2 + $0x98] sm:$0xff]
      %v195 = vld [vmem:[%s2 + $0xa0] sm:$0xff]
      %v196 = vld [vmem:[%s2 + $0xa8] sm:$0xff]
      %v197 = vld [vmem:[%s2 + $0xb0] sm:$0xff]
      %v198 = vld [vmem:[%s2 + $0xb8] sm:$0xff]
      %v199 = vld [vmem:[%s2 + $0xc0] sm:$0x1]
      %v200 = vld [vmem:[%s2 + $0xc1] sm:$0x1]
      %v201 = vld [vmem:[#allocation2] sm:$0xff]
      %v202 = vld [vmem:[#allocation2 + $0x8] sm:$0xff]
      %v203 = vlaneseq
      %v204 = vshrl.u32 %v203, 7
      %v205 = vsub.s32 0, %v204
      %v206 = vrot.slane %v199, %v205
      %v208 = vsel %vm173, %v202, 0
      %210 = vmatprep.subr.mxu0 0.0
      %211 = vmatpush1.msra.mxu0 %v190
      %212 = vmatprep.subr.mxu0 0.0
      %213 = vmatpush1.msra.mxu0 %v189
      %214 = vmatprep.subr.mxu0 0.0
      %215 = vmatpush1.msra.mxu0 %v188
      %216 = vmatprep.subr.mxu0 0.0
      %217 = vmatpush1.msra.mxu0 %v187
      %218 = vmatprep.subr.mxu0 0.0
      %219 = vmatpush1.msra.mxu0 %v186
      %220 = vmatprep.subr.mxu0 0.0
      %221 = vmatpush1.msra.mxu0 %v185
      %222 = vmatprep.subr.mxu0 0.0
      %223 = vmatpush1.msra.mxu0 %v184
      %224 = vmatprep.subr.mxu0 0.0
      %225 = vmatpush1.msra.mxu0 %v183
      %226 = vmatprep.subr.mxu0 0.0
      %227 = vmatpush1.msra.mxu0 %v182
      %228 = vmatprep.subr.mxu0 0.0
      %229 = vmatpush1.msra.mxu0 %v181
      %230 = vmatprep.subr.mxu0 0.0
      %231 = vmatpush1.msra.mxu0 %v180
      %232 = vmatprep.subr.mxu0 0.0
      %233 = vmatpush1.msra.mxu0 %v179
      %234 = vmatprep.subr.mxu0 0.0
      %235 = vmatpush1.msra.mxu0 %v178
      %236 = vmatprep.subr.mxu0 0.0
      %237 = vmatpush1.msra.mxu0 %v177
      %238 = vmatprep.subr.mxu0 0.0
      %239 = vmatpush1.msra.mxu0 %v176
      %240 = vmatprep.subr.mxu0 0.0
      %241 = vmatpush1.msra.mxu0 %v175
      %242 = vmatprep.subr.mxu0 0.0
      %243 = vmatpush2.msra.mxu0 0.0
      %244 = vmatprep.subr.mxu0 0.0
      %245 = vmatpush2.msra.mxu0 0.0
      %246 = vmatprep.subr.mxu0 0.0
      %247 = vmatpush2.msra.mxu0 0.0
      %248 = vmatprep.subr.mxu0 0.0
      %249 = vmatpush2.msra.mxu0 0.0
      %250 = vmatprep.subr.mxu0 0.0
      %251 = vmatpush2.msra.mxu0 0.0
      %252 = vmatprep.subr.mxu0 0.0
      %253 = vmatpush2.msra.mxu0 0.0
      %254 = vmatprep.subr.mxu0 0.0
      %255 = vmatpush2.msra.mxu0 0.0
      %256 = vmatprep.subr.mxu0 0.0
      %257 = vmatpush2.msra.mxu0 0.0
      %258 = vmatprep.subr.mxu0 0.0
      %259 = vmatpush2.msra.mxu0 %v198
      %260 = vmatprep.subr.mxu0 0.0
      %261 = vmatpush2.msra.mxu0 %v197
      %262 = vmatprep.subr.mxu0 0.0
      %263 = vmatpush2.msra.mxu0 %v196
      %264 = vmatprep.subr.mxu0 0.0
      %265 = vmatpush2.msra.mxu0 %v195
      %266 = vmatprep.subr.mxu0 0.0
      %267 = vmatpush2.msra.mxu0 %v194
      %268 = vmatprep.subr.mxu0 0.0
      %269 = vmatpush2.msra.mxu0 %v193
      %270 = vmatprep.subr.mxu0 0.0
      %271 = vmatpush2.msra.mxu0 %v192
      %272 = vmatprep.subr.mxu0 0.0
      %273 = vmatpush2.msra.mxu0 %v191
      %274 = vmatprep.mubr.f32.mxu0 %v208
      %275 = vmatmul.mubr.f32.gmra.mxu0 %v201
      %v276 = vpop.f32.mrf.mxu0
      %v277 = vadd.f32 %v206, %v276
      %v278 = vpop.f32.mrf.mxu0
      %279 = vdwg.mxu0
      %v280 = vtanh.pop %v277
      %v281 = vsub.f32 %v280, %v201
      %v282 = vlaneseq
      %v283 = vshrl.u32 %v282, 7
      %v284 = vsub.s32 0, %v283
      %v285 = vrot.slane %v200, %v284
      %v286 = vmul.f32 %v285, %v281
      %v287 = vadd.f32 %v201, %v286
      %288 = vst [vmem:[#allocation2] sm:$0xff] %v287
      %289 = vst [vmem:[%s165] sm:$0xff] %v287
      %p290 = scmp.lt.s32.totalorder %s14, 7
      %s291 = scalar_select %p290, %s14, 7
      %s292 = smul.addr %s291, 8
      %s293 = scalar_lea.vmem %s3, %s292
      // Predicated region
      $region37: #{group_esn_sequence.1} parent=31 // pred_check
        %p294 = pneg %p100
      $region38: #{group_esn_sequence.1} parent=31 // pred_check_branch
        %296 = sbr.rel (%p294) target = $region40
      $region39: #{group_esn_sequence.1} parent=31 // pred_region
        _
      $region40: #{group_esn_sequence.1} parent=31 // pred_fallthru
        _
    $region32: #{group_esn_sequence.1} parent=5 // pred_fallthru
      _
    %p297 = scmp.le.s32.totalorder 2, %s9
    // Predicated region
    $region41: #{group_esn_sequence.1} parent=5 // pred_check
      %p298 = pneg %p297
    $region42: #{group_esn_sequence.1} parent=5 // pred_check_branch
      %300 = sbr.rel (%p298) target = $region44
    $region43: #{group_esn_sequence.1} parent=5 // pred_region
      %s301 = ssub.s32 %s9, 2
      // Predicated region
      $region45: #{group_esn_sequence.1} parent=43 // pred_check
        %p302 = pneg %p106
      $region46: #{group_esn_sequence.1} parent=43 // pred_check_branch
        %304 = sbr.rel (%p302) target = $region48
      $region47: #{group_esn_sequence.1} parent=43 // pred_region
        %p305 = scmp.lt.s32.totalorder %s15, 7
        %s306 = scalar_select %p305, %s15, 7
        %s307 = smul.addr %s306, 8
        %s308 = scalar_lea.vmem %s3, %s307
      $region48: #{group_esn_sequence.1} parent=43 // pred_fallthru
        _
    $region44: #{group_esn_sequence.1} parent=5 // pred_fallthru
      _
  $region6: #{group_esn_sequence.1} parent=0 // loop_footer
    %s13 = sadd.s32 1, %s9
  $region7: #{group_esn_sequence.1} parent=0 // loop_footer_branch
    %8 = sbr.rel target = $region3
  $region8: #{group_esn_sequence.1} parent=0 // loop_exit
    _

</llo_original>
